<compile_context>
chip_gen: v5e
topology: v5e:2x2
jax: 0.10.0
libtpu: 0.0.40
codegen_flags: <defaults>
</compile_context>

<pallas_src>
import functools

import jax
import jax.numpy as jnp
from jax.experimental import pallas as pl
from jax.experimental.pallas import tpu as pltpu

LANES = 128
MAX_BLOCK_ROWS = 4096        # 4096 * 128 * 4 B = 2 MiB per f32 input block


def _ftl_partial_kernel(pred_ref, true_ref, mask_ref, out_ref,
                        acc_tp_ref, acc_mt_ref, acc_mp_ref,
                        *, rows_total, block_rows, blocks_per_core):
    i = pl.program_id(1)

    @pl.when(i == 0)
    def _init():
        acc_tp_ref[...] = jnp.zeros_like(acc_tp_ref)
        acc_mt_ref[...] = jnp.zeros_like(acc_mt_ref)
        acc_mp_ref[...] = jnp.zeros_like(acc_mp_ref)

    # Rows past the end of the (rows_total, LANES) array come from a partial
    # last block (or a clamped out-of-range block on the megacore split axis).
    # Their contents are unspecified (possibly NaN), so kill them with a select.
    row_start = (pl.program_id(0) * blocks_per_core + i) * block_rows
    row_idx = row_start + jax.lax.broadcasted_iota(
        jnp.int32, (block_rows, 1), 0)
    valid = row_idx < rows_total                       # (block_rows, 1)

    p = jax.nn.sigmoid(pred_ref[...].astype(jnp.float32))   # EUP
    p = jnp.where(valid, p, 0.0)
    t = jnp.where(valid, true_ref[...].astype(jnp.float32), 0.0)
    m = mask_ref[...].astype(jnp.float32)   # finite; invalid rows killed via t/p

    mt = m * t
    mp = m * p
    # Row-axis (sublane) reductions only; lane reduction deferred to epilogue.
    acc_tp_ref[...] += jnp.sum(mt * p, axis=0, keepdims=True)   # sum m*t*p
    acc_mt_ref[...] += jnp.sum(mt, axis=0, keepdims=True)       # sum m*t
    acc_mp_ref[...] += jnp.sum(mp, axis=0, keepdims=True)       # sum m*p

    @pl.when(i == pl.num_programs(1) - 1)
    def _finalize():
        out_ref[0, 0:1, :] = acc_tp_ref[...]
        out_ref[0, 1:2, :] = acc_mt_ref[...]
        out_ref[0, 2:3, :] = acc_mp_ref[...]


def masked_focal_tversky_loss(y_pred, y_true, mask,
                              alpha=0.7, gamma=0.75, smooth=1e-6,
                              max_block_rows=MAX_BLOCK_ROWS):
    # Stream native dtypes; only the mask gets a cheap 1-byte int8 conversion.
    pred = y_pred.reshape(-1)
    true = y_true.reshape(-1)
    msk = mask.reshape(-1)
    if msk.dtype != jnp.int8:
        msk = msk.astype(jnp.int8)

    n = pred.shape[0]
    rem = n % LANES
    if rem:                                  # tiny (<128 element) lane tail
        pad = LANES - rem
        pred = jnp.pad(pred, (0, pad))
        true = jnp.pad(true, (0, pad))
        msk = jnp.pad(msk, (0, pad))         # mask = 0 -> excluded
    rows = pred.shape[0] // LANES

    pred2 = pred.reshape(rows, LANES)
    true2 = true.reshape(rows, LANES)
    msk2 = msk.reshape(rows, LANES)

    block_rows = min(max_block_rows, rows)
    # Non-full-dim blocks must respect packed-dtype sublane tiling (int8: 32).
    assert block_rows == rows or block_rows % 32 == 0, block_rows
    blocks_total = pl.cdiv(rows, block_rows)
    num_splits = 2 if blocks_total >= 2 else 1       # megacore split (v7x)
    blocks_per_core = pl.cdiv(blocks_total, num_splits)

    tile_spec = pl.BlockSpec(
        (block_rows, LANES), lambda c, i: (c * blocks_per_core + i, 0))

    kernel = functools.partial(
        _ftl_partial_kernel, rows_total=rows, block_rows=block_rows,
        blocks_per_core=blocks_per_core)

    partials = pl.pallas_call(
        kernel,
        out_shape=jax.ShapeDtypeStruct((num_splits, 3, LANES), jnp.float32),
        grid_spec=pltpu.PrefetchScalarGridSpec(
            num_scalar_prefetch=0,
            grid=(num_splits, blocks_per_core),
            in_specs=[tile_spec, tile_spec, tile_spec],
            out_specs=pl.BlockSpec((1, 3, LANES), lambda c, i: (c, 0, 0)),
            scratch_shapes=[pltpu.VMEM((1, LANES), jnp.float32)] * 3,
        ),
        compiler_params=pltpu.CompilerParams(
            dimension_semantics=("parallel", "arbitrary")),
    )(pred2, true2, msk2)

    # Tiny epilogue in plain JAX: lane+core reduction and the tversky formula.
    sums = jnp.sum(partials, axis=(0, 2))            # (3,)
    tp = sums[0]
    fn = sums[1] - tp                                # sum m*t*(1-p)
    fp = sums[2] - tp                                # sum m*(1-t)*p
    tversky = (tp + smooth) / (tp + alpha * fn + (1.0 - alpha) * fp + smooth)
    # Clamp guards against tiny negative (1 - tversky) from fp rounding only;
    # mathematically 1 - tversky >= 0.
    return jnp.power(jnp.maximum(1.0 - tversky, 0.0), gamma)


def _reference(y_pred, y_true, mask, alpha=0.7, gamma=0.75, smooth=1e-6):
    m = mask.astype(jnp.float32).reshape(-1)
    p = jax.nn.sigmoid(y_pred.astype(jnp.float32).reshape(-1))
    t = y_true.astype(jnp.float32).reshape(-1)
    tp = jnp.sum(m * t * p)
    fn = jnp.sum(m * t * (1.0 - p))
    fp = jnp.sum(m * (1.0 - t) * p)
    ti = (tp + smooth) / (tp + alpha * fn + (1.0 - alpha) * fp + smooth)
    return jnp.power(1.0 - ti, gamma)


if __name__ == "__main__":
    def make(shape, key):
        k1, k2, k3 = jax.random.split(key, 3)
        y_pred = jax.random.normal(k1, shape, dtype=jnp.float32)
        y_true = (jax.random.uniform(k2, shape) > 0.5).astype(jnp.float32)
        mask = jax.random.uniform(k3, shape) > 0.3          # boolean mask
        return y_pred, y_true, mask

    k1, k2, k3 = jax.random.split(jax.random.PRNGKey(0), 3)

    # 1) NCHW input, lane-aligned total size (single full-array block).
    yp, yt, m = make((2, 4, 16, 16), k1)
    loss = jax.block_until_ready(masked_focal_tversky_loss(yp, yt, m))
    ref = _reference(yp, yt, m)
    assert jnp.allclose(loss, ref, atol=1e-5, rtol=1e-5), (loss, ref)

    # 2) Ragged total element count (exercises the <128-element tail pad path).
    yp, yt, m = make((2, 3, 17, 19), k2)
    loss = jax.block_until_ready(masked_focal_tversky_loss(yp, yt, m))
    ref = _reference(yp, yt, m)
    assert jnp.allclose(loss, ref, atol=1e-5, rtol=1e-5), (loss, ref)

    # 3) Multi-block path: 2-way parallel split + partial last block masking.
    yp, yt, m = make((1, 5, 40, 32), k3)          # 6400 elems -> 50 rows
    loss = jax.block_until_ready(
        masked_focal_tversky_loss(yp, yt, m, max_block_rows=32))
    ref = _reference(yp, yt, m)
    assert jnp.allclose(loss, ref, atol=1e-5, rtol=1e-5), (loss, ref)

    print("KERNEL_OK")
</pallas_src>

<mosaic_0001>
module attributes {stable_mosaic.version = 11 : i64} {
  func.func @_ftl_partial_kernel(%arg0: i32, %arg1: i32, %arg2: memref<16x128xf32, #tpu.memory_space<vmem>>, %arg3: memref<16x128xf32, #tpu.memory_space<vmem>>, %arg4: memref<16x128xi8, #tpu.memory_space<vmem>>, %arg5: memref<1x3x128xf32, #tpu.memory_space<vmem>>, %arg6: memref<1x128xf32, #tpu.memory_space<vmem>>, %arg7: memref<1x128xf32, #tpu.memory_space<vmem>>, %arg8: memref<1x128xf32, #tpu.memory_space<vmem>>) attributes {dimension_semantics = [#tpu.dimension_semantics<parallel>, #tpu.dimension_semantics<arbitrary>], iteration_bounds = array<i64: 1, 1>, scalar_prefetch = 0 : i64, scratch_operands = 3 : i64, tpu.core_type = #tpu.core_type<tc>, window_params = [{transform_indices = @transform_0, window_bounds = array<i64: 16, 128>}, {transform_indices = @transform_1, window_bounds = array<i64: 16, 128>}, {transform_indices = @transform_2, window_bounds = array<i64: 16, 128>}, {transform_indices = @transform_3, window_bounds = array<i64: 1, 3, 128>}]} {
    %c0_i32 = arith.constant 0 : i32
    %0 = arith.cmpi eq, %arg1, %c0_i32 : i32
    %1 = arith.extui %0 : i1 to i32
    %c0_i32_0 = arith.constant 0 : i32
    %2 = arith.cmpi ne, %1, %c0_i32_0 : i32
    scf.if %2 {
      %cst_26 = arith.constant 0.000000e+00 : f32
      %49 = vector.broadcast %cst_26 : f32 to vector<1x128xf32>
      %c0_27 = arith.constant 0 : index
      %c0_28 = arith.constant 0 : index
      %50 = vector.load %arg6[%c0_27, %c0_28] : memref<1x128xf32, #tpu.memory_space<vmem>>, vector<1x128xf32>
      tpu.vector_store %arg6[%c0_27, %c0_28], %49 {strides = array<i32>} : memref<1x128xf32, #tpu.memory_space<vmem>>, vector<1x128xf32>,
      %cst_29 = arith.constant 0.000000e+00 : f32
      %51 = vector.broadcast %cst_29 : f32 to vector<1x128xf32>
      %c0_30 = arith.constant 0 : index
      %c0_31 = arith.constant 0 : index
      %52 = vector.load %arg7[%c0_30, %c0_31] : memref<1x128xf32, #tpu.memory_space<vmem>>, vector<1x128xf32>
      tpu.vector_store %arg7[%c0_30, %c0_31], %51 {strides = array<i32>} : memref<1x128xf32, #tpu.memory_space<vmem>>, vector<1x128xf32>,
      %cst_32 = arith.constant 0.000000e+00 : f32
      %53 = vector.broadcast %cst_32 : f32 to vector<1x128xf32>
      %c0_33 = arith.constant 0 : index
      %c0_34 = arith.constant 0 : index
      %54 = vector.load %arg8[%c0_33, %c0_34] : memref<1x128xf32, #tpu.memory_space<vmem>>, vector<1x128xf32>
      tpu.vector_store %arg8[%c0_33, %c0_34], %53 {strides = array<i32>} : memref<1x128xf32, #tpu.memory_space<vmem>>, vector<1x128xf32>,
    } else {
    }
    %c1_i32 = arith.constant 1 : i32
    %3 = arith.muli %arg0, %c1_i32 : i32
    %4 = arith.addi %3, %arg1 : i32
    %c16_i32 = arith.constant 16 : i32
    %5 = arith.muli %4, %c16_i32 : i32
    %6 = tpu.iota {dimensions = array<i32: 0>} : vector<16x1xi32>
    %7 = vector.broadcast %5 : i32 to vector<16x1xi32>
    %8 = arith.addi %7, %6 : vector<16x1xi32>
    %c16_i32_1 = arith.constant 16 : i32
    %9 = vector.broadcast %c16_i32_1 : i32 to vector<16x1xi32>
    %10 = arith.cmpi slt, %8, %9 : vector<16x1xi32>
    %c0 = arith.constant 0 : index
    %c0_2 = arith.constant 0 : index
    %11 = vector.load %arg2[%c0, %c0_2] : memref<16x128xf32, #tpu.memory_space<vmem>>, vector<16x128xf32>
    %12 = arith.negf %11 : vector<16x128xf32>
    %13 = math.exp %12 : vector<16x128xf32>
    %cst = arith.constant 1.000000e+00 : f32
    %14 = vector.broadcast %cst : f32 to vector<16x128xf32>
    %15 = arith.addf %14, %13 : vector<16x128xf32>
    %16 = arith.divf %14, %15 : vector<16x128xf32>
    %cst_3 = arith.constant 0.000000e+00 : f32
    %17 = vector.shape_cast %10 : vector<16x1xi1> to vector<16x1xi1>
    %18 = vector.broadcast %17 : vector<16x1xi1> to vector<16x128xi1>
    %19 = vector.broadcast %cst_3 : f32 to vector<16x128xf32>
    %20 = arith.select %18, %16, %19 : vector<16x128xi1>, vector<16x128xf32>
    %c0_4 = arith.constant 0 : index
    %c0_5 = arith.constant 0 : index
    %21 = vector.load %arg3[%c0_4, %c0_5] : memref<16x128xf32, #tpu.memory_space<vmem>>, vector<16x128xf32>
    %cst_6 = arith.constant 0.000000e+00 : f32
    %22 = vector.shape_cast %10 : vector<16x1xi1> to vector<16x1xi1>
    %23 = vector.broadcast %22 : vector<16x1xi1> to vector<16x128xi1>
    %24 = vector.broadcast %cst_6 : f32 to vector<16x128xf32>
    %25 = arith.select %23, %21, %24 : vector<16x128xi1>, vector<16x128xf32>
    %c0_7 = arith.constant 0 : index
    %c0_8 = arith.constant 0 : index
    %26 = vector.load %arg4[%c0_7, %c0_8] : memref<16x128xi8, #tpu.memory_space<vmem>>, vector<16x128xi8>
    %27 = arith.sitofp %26 : vector<16x128xi8> to vector<16x128xf32>
    %28 = arith.mulf %27, %25 : vector<16x128xf32>
    %29 = arith.mulf %27, %20 : vector<16x128xf32>
    %c0_9 = arith.constant 0 : index
    %c0_10 = arith.constant 0 : index
    %30 = vector.load %arg6[%c0_9, %c0_10] : memref<1x128xf32, #tpu.memory_space<vmem>>, vector<1x128xf32>
    %31 = arith.mulf %28, %20 : vector<16x128xf32>
    %cst_11 = arith.constant dense<0.000000e+00> : vector<128xf32>
    %32 = vector.multi_reduction <add>, %31, %cst_11 [0] : vector<16x128xf32> to vector<128xf32>
    %33 = vector.shape_cast %32 : vector<128xf32> to vector<1x128xf32>
    %34 = arith.addf %30, %33 : vector<1x128xf32>
    %c0_12 = arith.constant 0 : index
    %c0_13 = arith.constant 0 : index
    %35 = vector.load %arg6[%c0_12, %c0_13] : memref<1x128xf32, #tpu.memory_space<vmem>>, vector<1x128xf32>
    tpu.vector_store %arg6[%c0_12, %c0_13], %34 {strides = array<i32>} : memref<1x128xf32, #tpu.memory_space<vmem>>, vector<1x128xf32>,
    %c0_14 = arith.constant 0 : index
    %c0_15 = arith.constant 0 : index
    %36 = vector.load %arg7[%c0_14, %c0_15] : memref<1x128xf32, #tpu.memory_space<vmem>>, vector<1x128xf32>
    %cst_16 = arith.constant dense<0.000000e+00> : vector<128xf32>
    %37 = vector.multi_reduction <add>, %28, %cst_16 [0] : vector<16x128xf32> to vector<128xf32>
    %38 = vector.shape_cast %37 : vector<128xf32> to vector<1x128xf32>
    %39 = arith.addf %36, %38 : vector<1x128xf32>
    %c0_17 = arith.constant 0 : index
    %c0_18 = arith.constant 0 : index
    %40 = vector.load %arg7[%c0_17, %c0_18] : memref<1x128xf32, #tpu.memory_space<vmem>>, vector<1x128xf32>
    tpu.vector_store %arg7[%c0_17, %c0_18], %39 {strides = array<i32>} : memref<1x128xf32, #tpu.memory_space<vmem>>, vector<1x128xf32>,
    %c0_19 = arith.constant 0 : index
    %c0_20 = arith.constant 0 : index
    %41 = vector.load %arg8[%c0_19, %c0_20] : memref<1x128xf32, #tpu.memory_space<vmem>>, vector<1x128xf32>
    %cst_21 = arith.constant dense<0.000000e+00> : vector<128xf32>
    %42 = vector.multi_reduction <add>, %29, %cst_21 [0] : vector<16x128xf32> to vector<128xf32>
    %43 = vector.shape_cast %42 : vector<128xf32> to vector<1x128xf32>
    %44 = arith.addf %41, %43 : vector<1x128xf32>
    %c0_22 = arith.constant 0 : index
    %c0_23 = arith.constant 0 : index
    %45 = vector.load %arg8[%c0_22, %c0_23] : memref<1x128xf32, #tpu.memory_space<vmem>>, vector<1x128xf32>
    tpu.vector_store %arg8[%c0_22, %c0_23], %44 {strides = array<i32>} : memref<1x128xf32, #tpu.memory_space<vmem>>, vector<1x128xf32>,
    %c0_i32_24 = arith.constant 0 : i32
    %46 = arith.cmpi eq, %arg1, %c0_i32_24 : i32
    %47 = arith.extui %46 : i1 to i32
    %c0_i32_25 = arith.constant 0 : i32
    %48 = arith.cmpi ne, %47, %c0_i32_25 : i32
    scf.if %48 {
      %c0_26 = arith.constant 0 : index
      %c0_27 = arith.constant 0 : index
      %49 = vector.load %arg6[%c0_26, %c0_27] : memref<1x128xf32, #tpu.memory_space<vmem>>, vector<1x128xf32>
      %c0_28 = arith.constant 0 : index
      %c0_29 = arith.constant 0 : index
      %c0_30 = arith.constant 0 : index
      %50 = vector.load %arg5[%c0_28, %c0_29, %c0_30] : memref<1x3x128xf32, #tpu.memory_space<vmem>>, vector<1x1x128xf32>
      %51 = vector.shape_cast %50 : vector<1x1x128xf32> to vector<1x128xf32>
      %52 = vector.shape_cast %49 : vector<1x128xf32> to vector<1x1x128xf32>
      tpu.vector_store %arg5[%c0_28, %c0_29, %c0_30], %52 {strides = array<i32>} : memref<1x3x128xf32, #tpu.memory_space<vmem>>, vector<1x1x128xf32>,
      %c0_31 = arith.constant 0 : index
      %c0_32 = arith.constant 0 : index
      %53 = vector.load %arg7[%c0_31, %c0_32] : memref<1x128xf32, #tpu.memory_space<vmem>>, vector<1x128xf32>
      %c0_33 = arith.constant 0 : index
      %c1 = arith.constant 1 : index
      %c0_34 = arith.constant 0 : index
      %54 = vector.load %arg5[%c0_33, %c1, %c0_34] : memref<1x3x128xf32, #tpu.memory_space<vmem>>, vector<1x1x128xf32>
      %55 = vector.shape_cast %54 : vector<1x1x128xf32> to vector<1x128xf32>
      %56 = vector.shape_cast %53 : vector<1x128xf32> to vector<1x1x128xf32>
      tpu.vector_store %arg5[%c0_33, %c1, %c0_34], %56 {strides = array<i32>} : memref<1x3x128xf32, #tpu.memory_space<vmem>>, vector<1x1x128xf32>,
      %c0_35 = arith.constant 0 : index
      %c0_36 = arith.constant 0 : index
      %57 = vector.load %arg8[%c0_35, %c0_36] : memref<1x128xf32, #tpu.memory_space<vmem>>, vector<1x128xf32>
      %c0_37 = arith.constant 0 : index
      %c2 = arith.constant 2 : index
      %c0_38 = arith.constant 0 : index
      %58 = vector.load %arg5[%c0_37, %c2, %c0_38] : memref<1x3x128xf32, #tpu.memory_space<vmem>>, vector<1x1x128xf32>
      %59 = vector.shape_cast %58 : vector<1x1x128xf32> to vector<1x128xf32>
      %60 = vector.shape_cast %57 : vector<1x128xf32> to vector<1x1x128xf32>
      tpu.vector_store %arg5[%c0_37, %c2, %c0_38], %60 {strides = array<i32>} : memref<1x3x128xf32, #tpu.memory_space<vmem>>, vector<1x1x128xf32>,
    } else {
    }
    return
  }
  func.func @transform_0(%arg0: i32, %arg1: i32) -> (i32, i32) {
    %c1_i32 = arith.constant 1 : i32
    %0 = arith.muli %arg0, %c1_i32 : i32
    %1 = arith.addi %0, %arg1 : i32
    %c0_i32 = arith.constant 0 : i32
    %c0_i32_0 = arith.constant 0 : i32
    return %1, %c0_i32 : i32, i32
  }
  func.func @transform_1(%arg0: i32, %arg1: i32) -> (i32, i32) {
    %c1_i32 = arith.constant 1 : i32
    %0 = arith.muli %arg0, %c1_i32 : i32
    %1 = arith.addi %0, %arg1 : i32
    %c0_i32 = arith.constant 0 : i32
    %c0_i32_0 = arith.constant 0 : i32
    return %1, %c0_i32 : i32, i32
  }
  func.func @transform_2(%arg0: i32, %arg1: i32) -> (i32, i32) {
    %c1_i32 = arith.constant 1 : i32
    %0 = arith.muli %arg0, %c1_i32 : i32
    %1 = arith.addi %0, %arg1 : i32
    %c0_i32 = arith.constant 0 : i32
    %c0_i32_0 = arith.constant 0 : i32
    return %1, %c0_i32 : i32, i32
  }
  func.func @transform_3(%arg0: i32, %arg1: i32) -> (i32, i32, i32) {
    %c0_i32 = arith.constant 0 : i32
    %c0_i32_0 = arith.constant 0 : i32
    %c0_i32_1 = arith.constant 0 : i32
    return %arg0, %c0_i32, %c0_i32_0 : i32, i32, i32
  }
}

</mosaic_0001>

<llo_original>
// kernel: tpu_custom_call.1
$region0: #{tpu_custom_call.1}
  #allocation0 [shape = 'u32[]', space=smem, size = 0x4, offset = 0x4, fixed_abs, tag = 'smem constant byte address 0x4 - core index']
  #allocation1 [shape = 'u32[72,128]{1,0:T(1,128)}', space=vmem, size = 0x9000, scoped, tag = 'internal scratch']
  #allocation2 [shape = 'f32[1,128]{1,0:T(1,128)}', space=vmem, size = 0x200, scoped, tag = 'scratch operand']
  #allocation3 [shape = 'f32[1,128]{1,0:T(1,128)}', space=vmem, size = 0x200, scoped, tag = 'scratch operand']
  #allocation4 [shape = 'f32[1,128]{1,0:T(1,128)}', space=vmem, size = 0x200, scoped, tag = 'scratch operand']
  %s0 = inlined_call_operand.hbm [shape: f32[16,128], index: 0, kind: input, shape index: {}]
  %s1 = inlined_call_operand.hbm [shape: f32[16,128], index: 1, kind: input, shape index: {}]
  %s2 = inlined_call_operand.hbm [shape: s8[16,128], index: 2, kind: input, shape index: {}]
  %s3 = inlined_call_operand.vmem [shape: f32[1,3,128], index: 3, kind: output, shape index: {}]
  %s4 = sld [smem:[#allocation0]]
  $region42: #{tpu_custom_call.1} parent=0
    _
  %s6 = ssub.s32 1, %s4
  %s7 = scalar_select 0, %s6, %s4
  $region1: #{tpu_custom_call.1} parent=0
    #allocation5 [shape = 'u8[8192]{0}', space=vmem, size = 0x2000, scoped, tag = 'input window, operand 0, single buffered']
    #allocation6 [shape = 's32[1]{0}', space=sflag, size = 0x4, scoped, tag = 'scoped memory for tpu_custom_call.1']
    #allocation7 [shape = 'u8[8192]{0}', space=vmem, size = 0x2000, scoped, tag = 'input window, operand 1, single buffered']
    #allocation8 [shape = 's32[1]{0}', space=sflag, size = 0x4, scoped, tag = 'scoped memory for tpu_custom_call.1']
    #allocation9 [shape = 'u8[2048]{0}', space=vmem, size = 0x800, scoped, tag = 'input window, operand 2, single buffered']
    %8 = vsyncpa [#allocation6], 0
    %9 = vsyncpa [#allocation8], 0
    // Predicated region
    $region2: #{tpu_custom_call.1} parent=1 // pred_check
      _
    $region3: #{tpu_custom_call.1} parent=1 // pred_check_branch
      %11 = sbr.rel (0) target = $region5
    $region4: #{tpu_custom_call.1} parent=1 // pred_region
      %s12 = sadd.s32 0, 0
      %s13 = smul.u32 2, %s12
      %15 = vsyncadd [#allocation6], 0
      %s16 = smul.addr %s13, 8
      %s17 = scalar_lea.hbm %s0, %s16
      %s18 = sshll.u32 %s17, 4
      %s19 = int_to_ptr.hbm [resolvable:$true] %s18
      %s20 = sshll.u32 [#allocation5], 4
      %s21 = int_to_ptr.vmem [resolvable:$true] %s20
      %26 = dma.hbm_to_vmem [thread:$0]  %s19, 256, %s21, [#allocation6], 128, 128, 8
    $region5: #{tpu_custom_call.1} parent=1 // pred_fallthru
      _
    // Predicated region
    $region6: #{tpu_custom_call.1} parent=1 // pred_check
      _
    $region7: #{tpu_custom_call.1} parent=1 // pred_check_branch
      %28 = sbr.rel (0) target = $region9
    $region8: #{tpu_custom_call.1} parent=1 // pred_region
      %s29 = sadd.s32 0, 0
      %s30 = smul.u32 2, %s29
      %32 = vsyncadd [#allocation8], 0
      %s33 = smul.addr %s30, 8
      %s34 = scalar_lea.hbm %s1, %s33
      %s35 = sshll.u32 %s34, 4
      %s36 = int_to_ptr.hbm [resolvable:$true] %s35
      %s37 = sshll.u32 [#allocation7], 4
      %s38 = int_to_ptr.vmem [resolvable:$true] %s37
      %43 = dma.hbm_to_vmem [thread:$0]  %s36, 256, %s38, [#allocation8], 128, 128, 8
    $region9: #{tpu_custom_call.1} parent=1 // pred_fallthru
      _
    // Predicated region
    $region10: #{tpu_custom_call.1} parent=1 // pred_check
      _
    $region11: #{tpu_custom_call.1} parent=1 // pred_check_branch
      %45 = sbr.rel (0) target = $region13
    $region12: #{tpu_custom_call.1} parent=1 // pred_region
      %s46 = sadd.s32 0, 0
      %s47 = smul.u32 2, %s46
      %49 = vsyncadd [#allocation8], 0
      %s50 = smul.addr %s47, 2
      %s51 = scalar_lea.hbm %s2, %s50
      %s52 = sshll.u32 %s51, 4
      %s53 = int_to_ptr.hbm [resolvable:$true] %s52
      %s54 = sshll.u32 [#allocation9], 4
      %s55 = int_to_ptr.vmem [resolvable:$true] %s54
      %60 = dma.hbm_to_vmem [thread:$0]  %s53, 64, %s55, [#allocation8], 32, 32, 2
    $region13: #{tpu_custom_call.1} parent=1 // pred_fallthru
      _
    // Predicated region
    $region14: #{tpu_custom_call.1} parent=1 // pred_check
      _
    $region15: #{tpu_custom_call.1} parent=1 // pred_check_branch
      %62 = sbr.rel (0) target = $region17
    $region16: #{tpu_custom_call.1} parent=1 // pred_region
      %64 = dma.done [#allocation6], 256
    $region17: #{tpu_custom_call.1} parent=1 // pred_fallthru
      _
    // Predicated region
    $region18: #{tpu_custom_call.1} parent=1 // pred_check
      _
    $region19: #{tpu_custom_call.1} parent=1 // pred_check_branch
      %66 = sbr.rel (0) target = $region21
    $region20: #{tpu_custom_call.1} parent=1 // pred_region
      %68 = dma.done [#allocation8], 256
    $region21: #{tpu_custom_call.1} parent=1 // pred_fallthru
      _
    // Predicated region
    $region22: #{tpu_custom_call.1} parent=1 // pred_check
      _
    $region23: #{tpu_custom_call.1} parent=1 // pred_check_branch
      %70 = sbr.rel (0) target = $region25
    $region24: #{tpu_custom_call.1} parent=1 // pred_region
      %72 = dma.done [#allocation8], 64
    $region25: #{tpu_custom_call.1} parent=1 // pred_fallthru
      _
    %s73 = sadd.s32 0, 0
    %s74 = smul.u32 2, %s73
    %s75 = sadd.s32 0, 0
    %s76 = smul.u32 2, %s75
    %s77 = sadd.s32 0, 0
    %s78 = smul.u32 2, %s77
    %p79 = scmp.eq.s32.totalorder 0, 0
    // Predicated region
    $region26: #{tpu_custom_call.1} parent=1 // pred_check
      %p80 = pneg %p79
    $region27: #{tpu_custom_call.1} parent=1 // pred_check_branch
      %82 = sbr.rel (%p80) target = $region29
    $region28: #{tpu_custom_call.1} parent=1 // pred_region
      %83 = vst [vmem:[#allocation2] sm:$0x1] 0.0
      %84 = vst [vmem:[#allocation3] sm:$0x1] 0.0
      %85 = vst [vmem:[#allocation4] sm:$0x1] 0.0
    $region29: #{tpu_custom_call.1} parent=1 // pred_fallthru
      _
    %s86 = sadd.s32 0, 0
    %s87 = smul.u32 %s86, 16
    %v88 = vlaneseq
    %v89 = vshrl.u32 %v88, 7
    %v90 = vadd.s32 %v89, 8
    %v91 = vstv %s87
    %v92 = vadd.s32 %v91, %v89
    %v93 = vadd.s32 %v91, %v90
    %vm94 = vcmp.lt.s32.totalorder %v92, 16
    %vm95 = vcmp.lt.s32.totalorder %v93, 16
    %v96 = vld [vmem:[#allocation5] sm:$0xff]
    %v97 = vld [vmem:[#allocation5 + $0x8] sm:$0xff]
    %v98 = vxor.u32 %v96, 2147483648
    %v99 = vxor.u32 %v97, 2147483648
    %v100 = vmul.f32 %v98, 1.442695
    %v101 = vpow.pop %v100
    %v102 = vmul.f32 %v99, 1.442695
    %v103 = vpow.pop %v102
    %v104 = vadd.f32 %v101, 1.0
    %v105 = vadd.f32 %v103, 1.0
    %v106 = vrcp.pop %v104
    %v107 = vmul.f32 %v104, %v106
    %v108 = vsub.f32 1.0, %v107
    %v109 = vmul.f32 %v106, %v108
    %v110 = vadd.f32 %v106, %v109
    %vm111 = vweird.f32 %v104
    %vm112 = vweird.f32 %v106
    %vm113 = vmor %vm111, %vm112
    %v114 = vsel %vm113, %v106, %v110
    %v115 = vand.u32 2147483647, %v104
    %vm116 = vcmp.eq.f32.partialorder %v115, 8.507059e+37
    %v117 = vand.u32 %v104, 2147483648
    %v118 = vor.u32 1.1754944e-38, %v117
    %v119 = vsel %vm116, %v118, %v114
    %v120 = vmul.f32 1.0, %v119
    %v121 = vrcp.pop %v105
    %v122 = vmul.f32 %v105, %v121
    %v123 = vsub.f32 1.0, %v122
    %v124 = vmul.f32 %v121, %v123
    %v125 = vadd.f32 %v121, %v124
    %vm126 = vweird.f32 %v105
    %vm127 = vweird.f32 %v121
    %vm128 = vmor %vm126, %vm127
    %v129 = vsel %vm128, %v121, %v125
    %v130 = vand.u32 2147483647, %v105
    %vm131 = vcmp.eq.f32.partialorder %v130, 8.507059e+37
    %v132 = vand.u32 %v105, 2147483648
    %v133 = vor.u32 1.1754944e-38, %v132
    %v134 = vsel %vm131, %v133, %v129
    %v135 = vmul.f32 1.0, %v134
    %v136 = vsel %vm94, 1, 0
    %v137 = vsel %vm95, 1, 0
    %vm138 = vcmp.eq.s32.totalorder %v136, 1
    %vm139 = vcmp.eq.s32.totalorder %v137, 1
    %v140 = vsel %vm138, %v120, 0.0
    %v141 = vsel %vm139, %v135, 0.0
    %v142 = vld [vmem:[#allocation7] sm:$0xff]
    %v143 = vld [vmem:[#allocation7 + $0x8] sm:$0xff]
    %v144 = vsel %vm138, %v142, 0.0
    %v145 = vsel %vm139, %v143, 0.0
    %v146 = vld [vmem:[#allocation9] sm:$0x3]
    %v147 = vld [vmem:[#allocation9 + $0x2] sm:$0x3]
    %v148 = vunpack.c.0.s8 %v146
    %v149 = vunpack.c.0.s8 %v147
    %v150 = vcvt.s32.f32 %v148
    %v151 = vcvt.s32.f32 %v149
    %v152 = vmul.f32 %v150, %v144
    %v153 = vmul.f32 %v151, %v145
    %v154 = vmul.f32 %v150, %v140
    %v155 = vmul.f32 %v151, %v141
    %v156 = vld [vmem:[#allocation2] sm:$0x1]
    %v157 = vmul.f32 %v152, %v140
    %v158 = vmul.f32 %v153, %v141
    %v159 = vadd.f32 %v157, %v158
    %v160 = vrot.slane %v159, 4
    %v161 = vadd.f32 %v159, %v160
    %v162 = vrot.slane %v161, 2
    %v163 = vadd.f32 %v161, %v162
    %v164 = vrot.slane %v163, 1
    %v165 = vadd.f32 %v163, %v164
    %v166 = vadd.f32 %v156, %v165
    %167 = vst [vmem:[#allocation2] sm:$0x1] %v166
    %v168 = vld [vmem:[#allocation3] sm:$0x1]
    %v169 = vadd.f32 %v152, %v153
    %v170 = vrot.slane %v169, 4
    %v171 = vadd.f32 %v169, %v170
    %v172 = vrot.slane %v171, 2
    %v173 = vadd.f32 %v171, %v172
    %v174 = vrot.slane %v173, 1
    %v175 = vadd.f32 %v173, %v174
    %v176 = vadd.f32 %v168, %v175
    %177 = vst [vmem:[#allocation3] sm:$0x1] %v176
    %v178 = vld [vmem:[#allocation4] sm:$0x1]
    %v179 = vadd.f32 %v154, %v155
    %v180 = vrot.slane %v179, 4
    %v181 = vadd.f32 %v179, %v180
    %v182 = vrot.slane %v181, 2
    %v183 = vadd.f32 %v181, %v182
    %v184 = vrot.slane %v183, 1
    %v185 = vadd.f32 %v183, %v184
    %v186 = vadd.f32 %v178, %v185
    %187 = vst [vmem:[#allocation4] sm:$0x1] %v186
    // Predicated region
    $region30: #{tpu_custom_call.1} parent=1 // pred_check
      %p188 = pneg %p79
    $region31: #{tpu_custom_call.1} parent=1 // pred_check_branch
      %190 = sbr.rel (%p188) target = $region33
    $region32: #{tpu_custom_call.1} parent=1 // pred_region
      %v191 = vld [vmem:[#allocation2] sm:$0x1]
      %192 = vst [vmem:[%s3] sm:$0x1] %v191
      %v193 = vld [vmem:[#allocation3] sm:$0x1]
      %194 = vst [vmem:[%s3 + $0x1] sm:$0x1] %v193
      %v195 = vld [vmem:[#allocation4] sm:$0x1]
      %196 = vst [vmem:[%s3 + $0x2] sm:$0x1] %v195
    $region33: #{tpu_custom_call.1} parent=1 // pred_fallthru
      _
    // Predicated region
    $region34: #{tpu_custom_call.1} parent=1 // pred_check
      _
    $region35: #{tpu_custom_call.1} parent=1 // pred_check_branch
      %198 = sbr.rel (0) target = $region37
    $region36: #{tpu_custom_call.1} parent=1 // pred_region
      _
    $region37: #{tpu_custom_call.1} parent=1 // pred_fallthru
      _
    // Predicated region
    $region38: #{tpu_custom_call.1} parent=1 // pred_check
      _
    $region39: #{tpu_custom_call.1} parent=1 // pred_check_branch
      %200 = sbr.rel (0) target = $region41
    $region40: #{tpu_custom_call.1} parent=1 // pred_region
      _
    $region41: #{tpu_custom_call.1} parent=1 // pred_fallthru
      _
    %201 = vsyncpa [#allocation6], 1
    %202 = vsyncpa [#allocation8], 1

</llo_original>
